<compile_context>
chip_gen: v6e
topology: v6e:2x2x1
jax: 0.10.0
libtpu: 0.0.40
codegen_flags: <defaults>
</compile_context>

<pallas_src>
import functools

import jax
import jax.numpy as jnp
from jax.experimental import pallas as pl
from jax.experimental.pallas import tpu as pltpu

_LANE = 128
_MIB = 1024 * 1024


def _round_up(a, m):
    return ((a + m - 1) // m) * m


@functools.lru_cache(maxsize=None)
def _vmem_capacity_bytes():
    """Physical VMEM per TensorCore (best effort, conservative fallback)."""
    try:
        return int(pltpu.get_tpu_info().vmem_capacity_bytes)
    except Exception:
        pass
    try:
        kind = jax.devices()[0].device_kind.lower()
        if "v7" in kind:
            return 64 * _MIB
        return 128 * _MIB  # v5e / v6e
    except Exception:
        return 64 * _MIB


def _default_batch_tile(n_p):
    cap = _vmem_capacity_bytes()
    if cap >= 96 * _MIB:                 # v5e / v6e: 128 MiB VMEM
        return 1024 if n_p <= 1024 else 512
    return 256                           # v7x: 64 MiB VMEM


# ----------------------------------------------------------------------------
# Kernel
# ----------------------------------------------------------------------------
def _mlp_kernel(x_ref, w1_ref, b1_ref, w2_ref, b2_ref, w3_ref, b3_ref,
                wo_ref, bo_ref, o_ref):
    cdt = w1_ref.dtype  # compute dtype for the MXU (bf16 by default)

    # layer1 + relu: f32 accumulation, f32 bias/ReLU, downcast at the ReLU.
    h = jnp.dot(x_ref[...].astype(cdt), w1_ref[...],
                preferred_element_type=jnp.float32)
    h = jnp.maximum(h + b1_ref[...], 0.0).astype(cdt)
    # layer2 + relu
    h = jnp.dot(h, w2_ref[...], preferred_element_type=jnp.float32)
    h = jnp.maximum(h + b2_ref[...], 0.0).astype(cdt)
    # layer3 + relu
    h = jnp.dot(h, w3_ref[...], preferred_element_type=jnp.float32)
    h = jnp.maximum(h + b3_ref[...], 0.0).astype(cdt)
    # out (no activation)
    y = jnp.dot(h, wo_ref[...], preferred_element_type=jnp.float32)
    o_ref[...] = (y + bo_ref[...]).astype(o_ref.dtype)


# ----------------------------------------------------------------------------
# One-time weight preparation (outside the per-call path)
# ----------------------------------------------------------------------------
def prepare_params(params, *, compute_dtype=jnp.bfloat16, lane_multiple=_LANE):
    """Pad feature dims to lane multiples and cast weights to compute_dtype.

    Run ONCE per set of weights.  Weights are stored transposed [in, out];
    biases are [1, out].  Use compute_dtype=jnp.float32 for full-precision
    parity with the PyTorch module (at higher DMA / lower MXU throughput).
    """
    in_dim, n = params["w1"].shape
    out_dim = params["wo"].shape[1]
    n_p = _round_up(n, lane_multiple)
    out_p = _round_up(out_dim, lane_multiple)

    def pad2(a, rows, cols, dt):
        return jnp.pad(a, ((0, rows - a.shape[0]),
                           (0, cols - a.shape[1]))).astype(dt)

    prepared = dict(
        w1=pad2(params["w1"], in_dim, n_p, compute_dtype),  # K stays = in_dim
        b1=pad2(params["b1"], 1, n_p, jnp.float32),
        w2=pad2(params["w2"], n_p, n_p, compute_dtype),
        b2=pad2(params["b2"], 1, n_p, jnp.float32),
        w3=pad2(params["w3"], n_p, n_p, compute_dtype),
        b3=pad2(params["b3"], 1, n_p, jnp.float32),
        wo=pad2(params["wo"], n_p, out_p, compute_dtype),
        bo=pad2(params["bo"], 1, out_p, jnp.float32),
    )
    prepared = jax.device_put(prepared)
    return prepared, out_dim


# ----------------------------------------------------------------------------
# Forward
# ----------------------------------------------------------------------------
@functools.partial(
    jax.jit, static_argnames=("out_dim", "batch_tile", "weight_buffers"))
def _mlp_forward_impl(x, prepared, *, out_dim, batch_tile, weight_buffers):
    B, in_dim = x.shape
    assert prepared["w1"].shape[0] == in_dim, "x feature dim != w1 rows"
    n_p = prepared["w1"].shape[1]
    out_p = prepared["wo"].shape[1]

    if batch_tile is None:
        batch_tile = _default_batch_tile(n_p)

    # Balanced batch tiles (pad only up to the next multiple of 8 per tile).
    # Ensure >= 2 grid steps for reasonably sized batches so the "parallel"
    # axis can shard across both v7x TensorCores.
    num_tiles = max(1, -(-B // batch_tile))
    if num_tiles == 1 and B >= 128:
        num_tiles = 2
    bt = _round_up(-(-B // num_tiles), 8)
    Bp = bt * num_tiles
    if Bp != B:
        x = jnp.pad(x, ((0, Bp - B), (0, 0)))

    # --- VMEM accounting: resident weights + streamed x/out + h intermediates.
    cdt_bytes = prepared["w1"].dtype.itemsize
    weight_bytes = (in_dim * n_p + 2 * n_p * n_p + n_p * out_p) * cdt_bytes
    bias_bytes = (3 * n_p + out_p) * 4
    resident = (weight_bytes + bias_bytes) * weight_buffers
    io_bytes = 2 * bt * (in_dim + out_p) * x.dtype.itemsize  # double-buffered
    scratch = 2 * bt * n_p * (4 + cdt_bytes)                 # live f32 + cast h
    need = resident + io_bytes + scratch

    cap = int(0.85 * _vmem_capacity_bytes())
    if need > cap:
        # TODO(synk): provide a K/N-blocked multi-pass fallback (emit_pipeline
        # over the hidden dim) for hidden sizes too large for resident weights.
        raise ValueError(
            f"Fused MLP footprint (~{need // _MIB} MiB) exceeds the VMEM "
            f"budget (~{cap // _MIB} MiB); reduce batch_tile / n_neurons or "
            f"use a blocked kernel.")
    vmem_limit = min(cap, max(32 * _MIB,
                              _round_up(need + need // 2 + 2 * _MIB, _MIB)))

    # Weights/biases are grid-invariant: constant index_map -> no re-DMA across
    # grid steps; single-buffer them when the jax version supports it.
    def wspec(shape):
        idx = lambda i: (0, 0)
        if weight_buffers == 1:
            try:
                return pl.BlockSpec(shape, idx, pipeline_mode=pl.Buffered(1))
            except TypeError:
                pass
        return pl.BlockSpec(shape, idx)

    flops = 2 * Bp * (in_dim * n_p + 2 * n_p * n_p + n_p * out_p)
    bytes_accessed = int(Bp * (in_dim + out_p) * x.dtype.itemsize
                         + weight_bytes + bias_bytes)

    out = pl.pallas_call(
        _mlp_kernel,
        out_shape=jax.ShapeDtypeStruct((Bp, out_p), x.dtype),
        grid_spec=pltpu.PrefetchScalarGridSpec(
            num_scalar_prefetch=0,
            grid=(num_tiles,),
            in_specs=[
                pl.BlockSpec((bt, in_dim), lambda i: (i, 0)),   # x tile
                wspec((in_dim, n_p)), wspec((1, n_p)),          # layer1
                wspec((n_p, n_p)), wspec((1, n_p)),             # layer2
                wspec((n_p, n_p)), wspec((1, n_p)),             # layer3
                wspec((n_p, out_p)), wspec((1, out_p)),         # out
            ],
            out_specs=pl.BlockSpec((bt, out_p), lambda i: (i, 0)),
        ),
        compiler_params=pltpu.CompilerParams(
            dimension_semantics=("parallel",),
            vmem_limit_bytes=vmem_limit),
        cost_estimate=pl.CostEstimate(
            flops=flops, transcendentals=0, bytes_accessed=bytes_accessed),
    )(x, prepared["w1"], prepared["b1"], prepared["w2"], prepared["b2"],
      prepared["w3"], prepared["b3"], prepared["wo"], prepared["bo"])

    return out[:B, :out_dim]


def mlp_forward(x, prepared, *, out_dim, batch_tile=None):
    """Fused MLP forward.  `prepared, out_dim = prepare_params(params)`."""
    try:
        return _mlp_forward_impl(x, prepared, out_dim=out_dim,
                                 batch_tile=batch_tile, weight_buffers=1)
    except Exception:
        # Fallback for jax versions that reject single-buffered pipeline
        # operands (pl.Buffered(1)).
        return _mlp_forward_impl(x, prepared, out_dim=out_dim,
                                 batch_tile=batch_tile, weight_buffers=2)


# ----------------------------------------------------------------------------
# Init + reference (for the self-test)
# ----------------------------------------------------------------------------
def init_mlp_params(key, input_size, n_neurons, output_size):
    """Mimics nn.Linear's U(-1/sqrt(fan_in), 1/sqrt(fan_in)) init.
    Weights stored transposed [in, out]; biases [1, out]."""
    def linear(k, fan_in, fan_out):
        kw, kb = jax.random.split(k)
        bound = 1.0 / jnp.sqrt(fan_in)
        w = jax.random.uniform(kw, (fan_in, fan_out), jnp.float32, -bound, bound)
        b = jax.random.uniform(kb, (1, fan_out), jnp.float32, -bound, bound)
        return w, b

    k1, k2, k3, k4 = jax.random.split(key, 4)
    w1, b1 = linear(k1, input_size, n_neurons)
    w2, b2 = linear(k2, n_neurons, n_neurons)
    w3, b3 = linear(k3, n_neurons, n_neurons)
    wo, bo = linear(k4, n_neurons, output_size)
    return dict(w1=w1, b1=b1, w2=w2, b2=b2, w3=w3, b3=b3, wo=wo, bo=bo)


def mlp_reference(x, p, compute_dtype=jnp.bfloat16):
    """Pure-JAX reference using the same compute-dtype dots with f32 accum."""
    def layer(h, w, b):
        return jnp.dot(h.astype(compute_dtype), w.astype(compute_dtype),
                       preferred_element_type=jnp.float32) + b
    h = jnp.maximum(layer(x, p["w1"], p["b1"]), 0.0)
    h = jnp.maximum(layer(h, p["w2"], p["b2"]), 0.0)
    h = jnp.maximum(layer(h, p["w3"], p["b3"]), 0.0)
    return layer(h, p["wo"], p["bo"])


if __name__ == "__main__":
    key = jax.random.PRNGKey(0)
    input_size, n_neurons, output_size = 16, 32, 8
    batch = 2

    kx, kp = jax.random.split(key)
    x = jax.random.normal(kx, (batch, input_size), jnp.float32)
    params = init_mlp_params(kp, input_size, n_neurons, output_size)

    # One-time weight preparation (padding + bf16 cast), then the fused kernel.
    prepared, out_dim = prepare_params(params)
    y = mlp_forward(x, prepared, out_dim=out_dim)
    jax.block_until_ready(y)

    y_ref_bf16 = mlp_reference(x, params, compute_dtype=jnp.bfloat16)
    y_ref_f32 = mlp_reference(x, params, compute_dtype=jnp.float32)

    assert y.shape == (batch, output_size)
    # Tight check vs. a reference using the same bf16-input / f32-accum dots.
    assert jnp.allclose(y, y_ref_bf16, atol=1e-3, rtol=1e-3)
    # Loose sanity check vs. the full-f32 reference (bf16 rounding of inputs).
    assert jnp.allclose(y, y_ref_f32, atol=5e-2, rtol=5e-2)

    print("KERNEL_OK")
</pallas_src>

<mosaic_0001>
module attributes {stable_mosaic.version = 11 : i64} {
  func.func @_mlp_kernel(%arg0: i32, %arg1: memref<8x16xf32, #tpu.memory_space<vmem>>, %arg2: memref<16x128xbf16, #tpu.memory_space<vmem>>, %arg3: memref<1x128xf32, #tpu.memory_space<vmem>>, %arg4: memref<128x128xbf16, #tpu.memory_space<vmem>>, %arg5: memref<1x128xf32, #tpu.memory_space<vmem>>, %arg6: memref<128x128xbf16, #tpu.memory_space<vmem>>, %arg7: memref<1x128xf32, #tpu.memory_space<vmem>>, %arg8: memref<128x128xbf16, #tpu.memory_space<vmem>>, %arg9: memref<1x128xf32, #tpu.memory_space<vmem>>, %arg10: memref<8x128xf32, #tpu.memory_space<vmem>>) attributes {dimension_semantics = [#tpu.dimension_semantics<parallel>], iteration_bounds = array<i64: 1>, scalar_prefetch = 0 : i64, scratch_operands = 0 : i64, tpu.core_type = #tpu.core_type<tc>, window_params = [{transform_indices = @transform_0, window_bounds = array<i64: 8, 16>}, {pipeline_mode = #tpu.pipeline_mode<synchronous>, transform_indices = @transform_1, window_bounds = array<i64: 16, 128>}, {pipeline_mode = #tpu.pipeline_mode<synchronous>, transform_indices = @transform_2, window_bounds = array<i64: 1, 128>}, {pipeline_mode = #tpu.pipeline_mode<synchronous>, transform_indices = @transform_3, window_bounds = array<i64: 128, 128>}, {pipeline_mode = #tpu.pipeline_mode<synchronous>, transform_indices = @transform_4, window_bounds = array<i64: 1, 128>}, {pipeline_mode = #tpu.pipeline_mode<synchronous>, transform_indices = @transform_5, window_bounds = array<i64: 128, 128>}, {pipeline_mode = #tpu.pipeline_mode<synchronous>, transform_indices = @transform_6, window_bounds = array<i64: 1, 128>}, {pipeline_mode = #tpu.pipeline_mode<synchronous>, transform_indices = @transform_7, window_bounds = array<i64: 128, 128>}, {pipeline_mode = #tpu.pipeline_mode<synchronous>, transform_indices = @transform_8, window_bounds = array<i64: 1, 128>}, {transform_indices = @transform_9, window_bounds = array<i64: 8, 128>}]} {
    %c0 = arith.constant 0 : index
    %c0_0 = arith.constant 0 : index
    %0 = vector.load %arg1[%c0, %c0_0] : memref<8x16xf32, #tpu.memory_space<vmem>>, vector<8x16xf32>
    %1 = arith.truncf %0 : vector<8x16xf32> to vector<8x16xbf16>
    %c0_1 = arith.constant 0 : index
    %c0_2 = arith.constant 0 : index
    %2 = vector.load %arg2[%c0_1, %c0_2] : memref<16x128xbf16, #tpu.memory_space<vmem>>, vector<16x128xbf16>
    %cst = arith.constant dense<0.000000e+00> : vector<8x128xf32>
    %3 = tpu.matmul %1, %2, %cst {dimension_numbers = #tpu.dot_dimension_numbers<[1], [0], [0], [1], [0, 0, 1, 1], [], []>} : vector<8x16xbf16>, vector<16x128xbf16>, vector<8x128xf32> -> vector<8x128xf32>
    %c0_3 = arith.constant 0 : index
    %c0_4 = arith.constant 0 : index
    %4 = vector.load %arg3[%c0_3, %c0_4] : memref<1x128xf32, #tpu.memory_space<vmem>>, vector<1x128xf32>
    %5 = vector.broadcast %4 : vector<1x128xf32> to vector<8x128xf32>
    %6 = arith.addf %3, %5 : vector<8x128xf32>
    %cst_5 = arith.constant 0.000000e+00 : f32
    %7 = vector.broadcast %cst_5 : f32 to vector<8x128xf32>
    %8 = arith.maximumf %6, %7 : vector<8x128xf32>
    %9 = arith.truncf %8 : vector<8x128xf32> to vector<8x128xbf16>
    %c0_6 = arith.constant 0 : index
    %c0_7 = arith.constant 0 : index
    %10 = vector.load %arg4[%c0_6, %c0_7] : memref<128x128xbf16, #tpu.memory_space<vmem>>, vector<128x128xbf16>
    %cst_8 = arith.constant dense<0.000000e+00> : vector<8x128xf32>
    %11 = tpu.matmul %9, %10, %cst_8 {dimension_numbers = #tpu.dot_dimension_numbers<[1], [0], [0], [1], [0, 0, 1, 1], [], []>} : vector<8x128xbf16>, vector<128x128xbf16>, vector<8x128xf32> -> vector<8x128xf32>
    %c0_9 = arith.constant 0 : index
    %c0_10 = arith.constant 0 : index
    %12 = vector.load %arg5[%c0_9, %c0_10] : memref<1x128xf32, #tpu.memory_space<vmem>>, vector<1x128xf32>
    %13 = vector.broadcast %12 : vector<1x128xf32> to vector<8x128xf32>
    %14 = arith.addf %11, %13 : vector<8x128xf32>
    %cst_11 = arith.constant 0.000000e+00 : f32
    %15 = vector.broadcast %cst_11 : f32 to vector<8x128xf32>
    %16 = arith.maximumf %14, %15 : vector<8x128xf32>
    %17 = arith.truncf %16 : vector<8x128xf32> to vector<8x128xbf16>
    %c0_12 = arith.constant 0 : index
    %c0_13 = arith.constant 0 : index
    %18 = vector.load %arg6[%c0_12, %c0_13] : memref<128x128xbf16, #tpu.memory_space<vmem>>, vector<128x128xbf16>
    %cst_14 = arith.constant dense<0.000000e+00> : vector<8x128xf32>
    %19 = tpu.matmul %17, %18, %cst_14 {dimension_numbers = #tpu.dot_dimension_numbers<[1], [0], [0], [1], [0, 0, 1, 1], [], []>} : vector<8x128xbf16>, vector<128x128xbf16>, vector<8x128xf32> -> vector<8x128xf32>
    %c0_15 = arith.constant 0 : index
    %c0_16 = arith.constant 0 : index
    %20 = vector.load %arg7[%c0_15, %c0_16] : memref<1x128xf32, #tpu.memory_space<vmem>>, vector<1x128xf32>
    %21 = vector.broadcast %20 : vector<1x128xf32> to vector<8x128xf32>
    %22 = arith.addf %19, %21 : vector<8x128xf32>
    %cst_17 = arith.constant 0.000000e+00 : f32
    %23 = vector.broadcast %cst_17 : f32 to vector<8x128xf32>
    %24 = arith.maximumf %22, %23 : vector<8x128xf32>
    %25 = arith.truncf %24 : vector<8x128xf32> to vector<8x128xbf16>
    %c0_18 = arith.constant 0 : index
    %c0_19 = arith.constant 0 : index
    %26 = vector.load %arg8[%c0_18, %c0_19] : memref<128x128xbf16, #tpu.memory_space<vmem>>, vector<128x128xbf16>
    %cst_20 = arith.constant dense<0.000000e+00> : vector<8x128xf32>
    %27 = tpu.matmul %25, %26, %cst_20 {dimension_numbers = #tpu.dot_dimension_numbers<[1], [0], [0], [1], [0, 0, 1, 1], [], []>} : vector<8x128xbf16>, vector<128x128xbf16>, vector<8x128xf32> -> vector<8x128xf32>
    %c0_21 = arith.constant 0 : index
    %c0_22 = arith.constant 0 : index
    %28 = vector.load %arg9[%c0_21, %c0_22] : memref<1x128xf32, #tpu.memory_space<vmem>>, vector<1x128xf32>
    %29 = vector.broadcast %28 : vector<1x128xf32> to vector<8x128xf32>
    %30 = arith.addf %27, %29 : vector<8x128xf32>
    %c0_23 = arith.constant 0 : index
    %c0_24 = arith.constant 0 : index
    %31 = vector.load %arg10[%c0_23, %c0_24] : memref<8x128xf32, #tpu.memory_space<vmem>>, vector<8x128xf32>
    tpu.vector_store %arg10[%c0_23, %c0_24], %30 {strides = array<i32>} : memref<8x128xf32, #tpu.memory_space<vmem>>, vector<8x128xf32>,
    return
  }
  func.func @transform_0(%arg0: i32) -> (i32, i32) {
    %c0_i32 = arith.constant 0 : i32
    %c0_i32_0 = arith.constant 0 : i32
    return %arg0, %c0_i32 : i32, i32
  }
  func.func @transform_1(%arg0: i32) -> (i32, i32) {
    %c0_i32 = arith.constant 0 : i32
    %c0_i32_0 = arith.constant 0 : i32
    %c0_i32_1 = arith.constant 0 : i32
    return %c0_i32, %c0_i32_0 : i32, i32
  }
  func.func @transform_2(%arg0: i32) -> (i32, i32) {
    %c0_i32 = arith.constant 0 : i32
    %c0_i32_0 = arith.constant 0 : i32
    %c0_i32_1 = arith.constant 0 : i32
    return %c0_i32, %c0_i32_0 : i32, i32
  }
  func.func @transform_3(%arg0: i32) -> (i32, i32) {
    %c0_i32 = arith.constant 0 : i32
    %c0_i32_0 = arith.constant 0 : i32
    %c0_i32_1 = arith.constant 0 : i32
    return %c0_i32, %c0_i32_0 : i32, i32
  }
  func.func @transform_4(%arg0: i32) -> (i32, i32) {
    %c0_i32 = arith.constant 0 : i32
    %c0_i32_0 = arith.constant 0 : i32
    %c0_i32_1 = arith.constant 0 : i32
    return %c0_i32, %c0_i32_0 : i32, i32
  }
  func.func @transform_5(%arg0: i32) -> (i32, i32) {
    %c0_i32 = arith.constant 0 : i32
    %c0_i32_0 = arith.constant 0 : i32
    %c0_i32_1 = arith.constant 0 : i32
    return %c0_i32, %c0_i32_0 : i32, i32
  }
  func.func @transform_6(%arg0: i32) -> (i32, i32) {
    %c0_i32 = arith.constant 0 : i32
    %c0_i32_0 = arith.constant 0 : i32
    %c0_i32_1 = arith.constant 0 : i32
    return %c0_i32, %c0_i32_0 : i32, i32
  }
  func.func @transform_7(%arg0: i32) -> (i32, i32) {
    %c0_i32 = arith.constant 0 : i32
    %c0_i32_0 = arith.constant 0 : i32
    %c0_i32_1 = arith.constant 0 : i32
    return %c0_i32, %c0_i32_0 : i32, i32
  }
  func.func @transform_8(%arg0: i32) -> (i32, i32) {
    %c0_i32 = arith.constant 0 : i32
    %c0_i32_0 = arith.constant 0 : i32
    %c0_i32_1 = arith.constant 0 : i32
    return %c0_i32, %c0_i32_0 : i32, i32
  }
  func.func @transform_9(%arg0: i32) -> (i32, i32) {
    %c0_i32 = arith.constant 0 : i32
    %c0_i32_0 = arith.constant 0 : i32
    return %arg0, %c0_i32 : i32, i32
  }
}

module attributes {stable_mosaic.version = 11 : i64} {
  func.func @_mlp_kernel(%arg0: i32, %arg1: memref<8x16xf32, #tpu.memory_space<vmem>>, %arg2: memref<16x128xbf16, #tpu.memory_space<vmem>>, %arg3: memref<1x128xf32, #tpu.memory_space<vmem>>, %arg4: memref<128x128xbf16, #tpu.memory_space<vmem>>, %arg5: memref<1x128xf32, #tpu.memory_space<vmem>>, %arg6: memref<128x128xbf16, #tpu.memory_space<vmem>>, %arg7: memref<1x128xf32, #tpu.memory_space<vmem>>, %arg8: memref<128x128xbf16, #tpu.memory_space<vmem>>, %arg9: memref<1x128xf32, #tpu.memory_space<vmem>>, %arg10: memref<8x128xf32, #tpu.memory_space<vmem>>) attributes {dimension_semantics = [#tpu.dimension_semantics<parallel>], iteration_bounds = array<i64: 1>, scalar_prefetch = 0 : i64, scratch_operands = 0 : i64, tpu.core_type = #tpu.core_type<tc>, window_params = [{transform_indices = @transform_0, window_bounds = array<i64: 8, 16>}, {pipeline_mode = #tpu.pipeline_mode<synchronous>, transform_indices = @transform_1, window_bounds = array<i64: 16, 128>}, {pipeline_mode = #tpu.pipeline_mode<synchronous>, transform_indices = @transform_2, window_bounds = array<i64: 1, 128>}, {pipeline_mode = #tpu.pipeline_mode<synchronous>, transform_indices = @transform_3, window_bounds = array<i64: 128, 128>}, {pipeline_mode = #tpu.pipeline_mode<synchronous>, transform_indices = @transform_4, window_bounds = array<i64: 1, 128>}, {pipeline_mode = #tpu.pipeline_mode<synchronous>, transform_indices = @transform_5, window_bounds = array<i64: 128, 128>}, {pipeline_mode = #tpu.pipeline_mode<synchronous>, transform_indices = @transform_6, window_bounds = array<i64: 1, 128>}, {pipeline_mode = #tpu.pipeline_mode<synchronous>, transform_indices = @transform_7, window_bounds = array<i64: 128, 128>}, {pipeline_mode = #tpu.pipeline_mode<synchronous>, transform_indices = @transform_8, window_bounds = array<i64: 1, 128>}, {transform_indices = @transform_9, window_bounds = array<i64: 8, 128>}]} {
    %c0 = arith.constant 0 : index
    %c0_0 = arith.constant 0 : index
    %0 = vector.load %arg1[%c0, %c0_0] : memref<8x16xf32, #tpu.memory_space<vmem>>, vector<8x16xf32>
    %1 = arith.truncf %0 : vector<8x16xf32> to vector<8x16xbf16>
    %c0_1 = arith.constant 0 : index
    %c0_2 = arith.constant 0 : index
    %2 = vector.load %arg2[%c0_1, %c0_2] : memref<16x128xbf16, #tpu.memory_space<vmem>>, vector<16x128xbf16>
    %cst = arith.constant dense<0.000000e+00> : vector<8x128xf32>
    %3 = tpu.matmul %1, %2, %cst {dimension_numbers = #tpu.dot_dimension_numbers<[1], [0], [0], [1], [0, 0, 1, 1], [], []>} : vector<8x16xbf16>, vector<16x128xbf16>, vector<8x128xf32> -> vector<8x128xf32>
    %c0_3 = arith.constant 0 : index
    %c0_4 = arith.constant 0 : index
    %4 = vector.load %arg3[%c0_3, %c0_4] : memref<1x128xf32, #tpu.memory_space<vmem>>, vector<1x128xf32>
    %5 = vector.broadcast %4 : vector<1x128xf32> to vector<8x128xf32>
    %6 = arith.addf %3, %5 : vector<8x128xf32>
    %cst_5 = arith.constant 0.000000e+00 : f32
    %7 = vector.broadcast %cst_5 : f32 to vector<8x128xf32>
    %8 = arith.maximumf %6, %7 : vector<8x128xf32>
    %9 = arith.truncf %8 : vector<8x128xf32> to vector<8x128xbf16>
    %c0_6 = arith.constant 0 : index
    %c0_7 = arith.constant 0 : index
    %10 = vector.load %arg4[%c0_6, %c0_7] : memref<128x128xbf16, #tpu.memory_space<vmem>>, vector<128x128xbf16>
    %cst_8 = arith.constant dense<0.000000e+00> : vector<8x128xf32>
    %11 = tpu.matmul %9, %10, %cst_8 {dimension_numbers = #tpu.dot_dimension_numbers<[1], [0], [0], [1], [0, 0, 1, 1], [], []>} : vector<8x128xbf16>, vector<128x128xbf16>, vector<8x128xf32> -> vector<8x128xf32>
    %c0_9 = arith.constant 0 : index
    %c0_10 = arith.constant 0 : index
    %12 = vector.load %arg5[%c0_9, %c0_10] : memref<1x128xf32, #tpu.memory_space<vmem>>, vector<1x128xf32>
    %13 = vector.broadcast %12 : vector<1x128xf32> to vector<8x128xf32>
    %14 = arith.addf %11, %13 : vector<8x128xf32>
    %cst_11 = arith.constant 0.000000e+00 : f32
    %15 = vector.broadcast %cst_11 : f32 to vector<8x128xf32>
    %16 = arith.maximumf %14, %15 : vector<8x128xf32>
    %17 = arith.truncf %16 : vector<8x128xf32> to vector<8x128xbf16>
    %c0_12 = arith.constant 0 : index
    %c0_13 = arith.constant 0 : index
    %18 = vector.load %arg6[%c0_12, %c0_13] : memref<128x128xbf16, #tpu.memory_space<vmem>>, vector<128x128xbf16>
    %cst_14 = arith.constant dense<0.000000e+00> : vector<8x128xf32>
    %19 = tpu.matmul %17, %18, %cst_14 {dimension_numbers = #tpu.dot_dimension_numbers<[1], [0], [0], [1], [0, 0, 1, 1], [], []>} : vector<8x128xbf16>, vector<128x128xbf16>, vector<8x128xf32> -> vector<8x128xf32>
    %c0_15 = arith.constant 0 : index
    %c0_16 = arith.constant 0 : index
    %20 = vector.load %arg7[%c0_15, %c0_16] : memref<1x128xf32, #tpu.memory_space<vmem>>, vector<1x128xf32>
    %21 = vector.broadcast %20 : vector<1x128xf32> to vector<8x128xf32>
    %22 = arith.addf %19, %21 : vector<8x128xf32>
    %cst_17 = arith.constant 0.000000e+00 : f32
    %23 = vector.broadcast %cst_17 : f32 to vector<8x128xf32>
    %24 = arith.maximumf %22, %23 : vector<8x128xf32>
    %25 = arith.truncf %24 : vector<8x128xf32> to vector<8x128xbf16>
    %c0_18 = arith.constant 0 : index
    %c0_19 = arith.constant 0 : index
    %26 = vector.load %arg8[%c0_18, %c0_19] : memref<128x128xbf16, #tpu.memory_space<vmem>>, vector<128x128xbf16>
    %cst_20 = arith.constant dense<0.000000e+00> : vector<8x128xf32>
    %27 = tpu.matmul %25, %26, %cst_20 {dimension_numbers = #tpu.dot_dimension_numbers<[1], [0], [0], [1], [0, 0, 1, 1], [], []>} : vector<8x128xbf16>, vector<128x128xbf16>, vector<8x128xf32> -> vector<8x128xf32>
    %c0_21 = arith.constant 0 : index
    %c0_22 = arith.constant 0 : index
    %28 = vector.load %arg9[%c0_21, %c0_22] : memref<1x128xf32, #tpu.memory_space<vmem>>, vector<1x128xf32>
    %29 = vector.broadcast %28 : vector<1x128xf32> to vector<8x128xf32>
    %30 = arith.addf %27, %29 : vector<8x128xf32>
    %c0_23 = arith.constant 0 : index
    %c0_24 = arith.constant 0 : index
    %31 = vector.load %arg10[%c0_23, %c0_24] : memref<8x128xf32, #tpu.memory_space<vmem>>, vector<8x128xf32>
    tpu.vector_store %arg10[%c0_23, %c0_24], %30 {strides = array<i32>} : memref<8x128xf32, #tpu.memory_space<vmem>>, vector<8x128xf32>,
    return
  }
  func.func @transform_0(%arg0: i32) -> (i32, i32) {
    %c0_i32 = arith.constant 0 : i32
    %c0_i32_0 = arith.constant 0 : i32
    return %arg0, %c0_i32 : i32, i32
  }
  func.func @transform_1(%arg0: i32) -> (i32, i32) {
    %c0_i32 = arith.constant 0 : i32
    %c0_i32_0 = arith.constant 0 : i32
    %c0_i32_1 = arith.constant 0 : i32
    return %c0_i32, %c0_i32_0 : i32, i32
  }
  func.func @transform_2(%arg0: i32) -> (i32, i32) {
    %c0_i32 = arith.constant 0 : i32
    %c0_i32_0 = arith.constant 0 : i32
    %c0_i32_1 = arith.constant 0 : i32
    return %c0_i32, %c0_i32_0 : i32, i32
  }
  func.func @transform_3(%arg0: i32) -> (i32, i32) {
    %c0_i32 = arith.constant 0 : i32
    %c0_i32_0 = arith.constant 0 : i32
    %c0_i32_1 = arith.constant 0 : i32
    return %c0_i32, %c0_i32_0 : i32, i32
  }
  func.func @transform_4(%arg0: i32) -> (i32, i32) {
    %c0_i32 = arith.constant 0 : i32
    %c0_i32_0 = arith.constant 0 : i32
    %c0_i32_1 = arith.constant 0 : i32
    return %c0_i32, %c0_i32_0 : i32, i32
  }
  func.func @transform_5(%arg0: i32) -> (i32, i32) {
    %c0_i32 = arith.constant 0 : i32
    %c0_i32_0 = arith.constant 0 : i32
    %c0_i32_1 = arith.constant 0 : i32
    return %c0_i32, %c0_i32_0 : i32, i32
  }
  func.func @transform_6(%arg0: i32) -> (i32, i32) {
    %c0_i32 = arith.constant 0 : i32
    %c0_i32_0 = arith.constant 0 : i32
    %c0_i32_1 = arith.constant 0 : i32
    return %c0_i32, %c0_i32_0 : i32, i32
  }
  func.func @transform_7(%arg0: i32) -> (i32, i32) {
    %c0_i32 = arith.constant 0 : i32
    %c0_i32_0 = arith.constant 0 : i32
    %c0_i32_1 = arith.constant 0 : i32
    return %c0_i32, %c0_i32_0 : i32, i32
  }
  func.func @transform_8(%arg0: i32) -> (i32, i32) {
    %c0_i32 = arith.constant 0 : i32
    %c0_i32_0 = arith.constant 0 : i32
    %c0_i32_1 = arith.constant 0 : i32
    return %c0_i32, %c0_i32_0 : i32, i32
  }
  func.func @transform_9(%arg0: i32) -> (i32, i32) {
    %c0_i32 = arith.constant 0 : i32
    %c0_i32_0 = arith.constant 0 : i32
    return %arg0, %c0_i32 : i32, i32
  }
}

</mosaic_0001>

<llo_original>
// kernel: _mlp_forward_impl.1
$region0: #{_mlp_forward_impl.1}
  #allocation0 [shape = 'u32[]', space=smem, size = 0x4, offset = 0x4, fixed_abs, tag = 'smem constant byte address 0x4 - core index']
  #allocation1 [shape = 'u32[144,128]{1,0:T(1,128)}', space=vmem, size = 0x12000, scoped, tag = 'internal scratch']
  %s0 = inlined_call_operand.vmem [shape: f32[8,16], index: 0, kind: input, shape index: {}]
  %s1 = inlined_call_operand.vmem [shape: bf16[16,128], index: 1, kind: input, shape index: {}]
  %s2 = inlined_call_operand.vmem [shape: f32[1,128], index: 2, kind: input, shape index: {}]
  %s3 = inlined_call_operand.hbm [shape: bf16[128,128], index: 3, kind: input, shape index: {}]
  %s4 = inlined_call_operand.vmem [shape: f32[1,128], index: 4, kind: input, shape index: {}]
  %s5 = inlined_call_operand.hbm [shape: bf16[128,128], index: 5, kind: input, shape index: {}]
  %s6 = inlined_call_operand.vmem [shape: f32[1,128], index: 6, kind: input, shape index: {}]
  %s7 = inlined_call_operand.hbm [shape: bf16[128,128], index: 7, kind: input, shape index: {}]
  %s8 = inlined_call_operand.vmem [shape: f32[1,128], index: 8, kind: input, shape index: {}]
  %s9 = inlined_call_operand.vmem [shape: f32[8,128], index: 9, kind: output, shape index: {}]
  %s10 = sld [smem:[#allocation0]]
  $region58: #{_mlp_forward_impl.1} parent=0
    _
  %s12 = ssub.s32 1, %s10
  %s13 = scalar_select 0, %s12, %s10
  $region1: #{_mlp_forward_impl.1} parent=0
    #allocation2 [shape = 'u8[32768]{0}', space=vmem, size = 0x8000, scoped, tag = 'input window, operand 3, single buffered']
    #allocation3 [shape = 's32[1]{0}', space=sflag, size = 0x4, scoped, tag = 'scoped memory for _mlp_forward_impl.1']
    #allocation4 [shape = 'u8[32768]{0}', space=vmem, size = 0x8000, scoped, tag = 'input window, operand 5, single buffered']
    #allocation5 [shape = 's32[1]{0}', space=sflag, size = 0x4, scoped, tag = 'scoped memory for _mlp_forward_impl.1']
    #allocation6 [shape = 'u8[32768]{0}', space=vmem, size = 0x8000, scoped, tag = 'input window, operand 7, single buffered']
    %14 = vsyncpa [#allocation3], 0
    %15 = vsyncpa [#allocation5], 0
    // Predicated region
    $region2: #{_mlp_forward_impl.1} parent=1 // pred_check
      _
    $region3: #{_mlp_forward_impl.1} parent=1 // pred_check_branch
      %17 = sbr.rel (0) target = $region5
    $region4: #{_mlp_forward_impl.1} parent=1 // pred_region
      _
    $region5: #{_mlp_forward_impl.1} parent=1 // pred_fallthru
      _
    // Predicated region
    $region6: #{_mlp_forward_impl.1} parent=1 // pred_check
      _
    $region7: #{_mlp_forward_impl.1} parent=1 // pred_check_branch
      %19 = sbr.rel (0) target = $region9
    $region8: #{_mlp_forward_impl.1} parent=1 // pred_region
      _
    $region9: #{_mlp_forward_impl.1} parent=1 // pred_fallthru
      _
    // Predicated region
    $region10: #{_mlp_forward_impl.1} parent=1 // pred_check
      _
    $region11: #{_mlp_forward_impl.1} parent=1 // pred_check_branch
      %21 = sbr.rel (0) target = $region13
    $region12: #{_mlp_forward_impl.1} parent=1 // pred_region
      _
    $region13: #{_mlp_forward_impl.1} parent=1 // pred_fallthru
      _
    // Predicated region
    $region14: #{_mlp_forward_impl.1} parent=1 // pred_check
      _
    $region15: #{_mlp_forward_impl.1} parent=1 // pred_check_branch
      %23 = sbr.rel (0) target = $region17
    $region16: #{_mlp_forward_impl.1} parent=1 // pred_region
      %s25 = ssub.s32 1024, 1024
      %26 = vsyncadd [#allocation3], %s25
      %s27 = sshll.u32 [#allocation2], 4
      %s28 = int_to_ptr.vmem [resolvable:$true] %s27
      %33 = dma.hbm_to_vmem [thread:$0]  %s3, 1024, %s28, [#allocation3], 64, 64, 4
    $region17: #{_mlp_forward_impl.1} parent=1 // pred_fallthru
      _
    // Predicated region
    $region18: #{_mlp_forward_impl.1} parent=1 // pred_check
      _
    $region19: #{_mlp_forward_impl.1} parent=1 // pred_check_branch
      %35 = sbr.rel (0) target = $region21
    $region20: #{_mlp_forward_impl.1} parent=1 // pred_region
      _
    $region21: #{_mlp_forward_impl.1} parent=1 // pred_fallthru
      _
    // Predicated region
    $region22: #{_mlp_forward_impl.1} parent=1 // pred_check
      _
    $region23: #{_mlp_forward_impl.1} parent=1 // pred_check_branch
      %37 = sbr.rel (0) target = $region25
    $region24: #{_mlp_forward_impl.1} parent=1 // pred_region
      %s39 = ssub.s32 1024, 1024
      %40 = vsyncadd [#allocation5], %s39
      %s41 = sshll.u32 [#allocation4], 4
      %s42 = int_to_ptr.vmem [resolvable:$true] %s41
      %47 = dma.hbm_to_vmem [thread:$0]  %s5, 1024, %s42, [#allocation5], 64, 64, 4
    $region25: #{_mlp_forward_impl.1} parent=1 // pred_fallthru
      _
    // Predicated region
    $region26: #{_mlp_forward_impl.1} parent=1 // pred_check
      _
    $region27: #{_mlp_forward_impl.1} parent=1 // pred_check_branch
      %49 = sbr.rel (0) target = $region29
    $region28: #{_mlp_forward_impl.1} parent=1 // pred_region
      _
    $region29: #{_mlp_forward_impl.1} parent=1 // pred_fallthru
      _
    // Predicated region
    $region30: #{_mlp_forward_impl.1} parent=1 // pred_check
      _
    $region31: #{_mlp_forward_impl.1} parent=1 // pred_check_branch
      %51 = sbr.rel (0) target = $region33
    $region32: #{_mlp_forward_impl.1} parent=1 // pred_region
      %s53 = ssub.s32 1024, 1024
      %54 = vsyncadd [#allocation5], %s53
      %s55 = sshll.u32 [#allocation6], 4
      %s56 = int_to_ptr.vmem [resolvable:$true] %s55
      %61 = dma.hbm_to_vmem [thread:$0]  %s7, 1024, %s56, [#allocation5], 64, 64, 4
    $region33: #{_mlp_forward_impl.1} parent=1 // pred_fallthru
      _
    // Predicated region
    $region34: #{_mlp_forward_impl.1} parent=1 // pred_check
      _
    $region35: #{_mlp_forward_impl.1} parent=1 // pred_check_branch
      %63 = sbr.rel (0) target = $region37
    $region36: #{_mlp_forward_impl.1} parent=1 // pred_region
      _
    $region37: #{_mlp_forward_impl.1} parent=1 // pred_fallthru
      _
    // Predicated region
    $region38: #{_mlp_forward_impl.1} parent=1 // pred_check
      _
    $region39: #{_mlp_forward_impl.1} parent=1 // pred_check_branch
      %65 = sbr.rel (0) target = $region41
    $region40: #{_mlp_forward_impl.1} parent=1 // pred_region
      %66 = dma.done [#allocation3], 1024
    $region41: #{_mlp_forward_impl.1} parent=1 // pred_fallthru
      _
    // Predicated region
    $region42: #{_mlp_forward_impl.1} parent=1 // pred_check
      _
    $region43: #{_mlp_forward_impl.1} parent=1 // pred_check_branch
      %68 = sbr.rel (0) target = $region45
    $region44: #{_mlp_forward_impl.1} parent=1 // pred_region
      %69 = dma.done [#allocation5], 1024
    $region45: #{_mlp_forward_impl.1} parent=1 // pred_fallthru
      _
    // Predicated region
    $region46: #{_mlp_forward_impl.1} parent=1 // pred_check
      _
    $region47: #{_mlp_forward_impl.1} parent=1 // pred_check_branch
      %71 = sbr.rel (0) target = $region49
    $region48: #{_mlp_forward_impl.1} parent=1 // pred_region
      %72 = dma.done [#allocation5], 1024
    $region49: #{_mlp_forward_impl.1} parent=1 // pred_fallthru
      _
    %v74 = vld [vmem:[%s0] sm:$0xff]
    %v75 = vpack.c.bf16 %v74, %v74
    %v76 = vld [vmem:[%s1] sm:$0xf]
    %v77 = vld [vmem:[%s1 + $0x4] sm:$0xf]
    %v78 = vld [vmem:[%s2] sm:$0x1]
    %v80 = vlaneseq
    %v81 = vshrl.u32 %v80, 7
    %v82 = vsub.s32 0, %v81
    %v83 = vrot.slane %v78, %v82
    %v87 = vunpack.c.l.b16 %v76
    %v88 = vunpack.c.l.b16 %v77
    %v89 = vpack.c.b16 %v88, %v87
    %vm91 = vcmask 130048
    %v93 = vsel %vm91, %v75, 0
    %95 = vmatprep.subr.bf16.mxu0 0
    %96 = vmatpush1.bf16.msra.mxu0 0
    %97 = vmatprep.subr.bf16.mxu0 0
    %98 = vmatpush1.bf16.msra.mxu0 0
    %99 = vmatprep.subr.bf16.mxu0 0
    %100 = vmatpush1.bf16.msra.mxu0 0
    %101 = vmatprep.subr.bf16.mxu0 0
    %102 = vmatpush1.bf16.msra.mxu0 0
    %103 = vmatprep.subr.bf16.mxu0 0
    %104 = vmatpush1.bf16.msra.mxu0 0
    %105 = vmatprep.subr.bf16.mxu0 0
    %106 = vmatpush1.bf16.msra.mxu0 0
    %107 = vmatprep.subr.bf16.mxu0 0
    %108 = vmatpush1.bf16.msra.mxu0 0
    %109 = vmatprep.subr.bf16.mxu0 0
    %110 = vmatpush1.bf16.msra.mxu0 %v89
    %111 = vmatprep.subr.bf16.mxu0 0
    %112 = vmatpush2.bf16.msra.mxu0 0
    %113 = vmatprep.subr.bf16.mxu0 0
    %114 = vmatpush2.bf16.msra.mxu0 0
    %115 = vmatprep.subr.bf16.mxu0 0
    %116 = vmatpush2.bf16.msra.mxu0 0
    %117 = vmatprep.subr.bf16.mxu0 0
    %118 = vmatpush2.bf16.msra.mxu0 0
    %119 = vmatprep.subr.bf16.mxu0 0
    %120 = vmatpush2.bf16.msra.mxu0 0
    %121 = vmatprep.subr.bf16.mxu0 0
    %122 = vmatpush2.bf16.msra.mxu0 0
    %123 = vmatprep.subr.bf16.mxu0 0
    %124 = vmatpush2.bf16.msra.mxu0 0
    %125 = vmatprep.subr.bf16.mxu0 0
    %126 = vmatpush2.bf16.msra.mxu0 0
    %127 = vmatprep.mubr.bf16.mxu0 0
    %128 = vmatmul.mubr.bf16.gmra.mxu0 %v93
    %v129 = vpop.f32.mrf.mxu0
    %v130 = vadd.f32 %v83, %v129
    %v131 = vpop.f32.mrf.mxu0
    %v132 = vpop.f32.mrf.mxu0
    %v133 = vpop.f32.mrf.mxu0
    %134 = vdwg.mxu0
    %v135 = vmax.f32 %v130, 0.0
    %v136 = vpack.c.bf16 %v135, %v135
    %v137 = vld [vmem:[#allocation2] sm:$0xf]
    %v138 = vld [vmem:[#allocation2 + $0x4] sm:$0xf]
    %v139 = vld [vmem:[#allocation2 + $0x8] sm:$0xf]
    %v140 = vld [vmem:[#allocation2 + $0xc] sm:$0xf]
    %v141 = vld [vmem:[#allocation2 + $0x10] sm:$0xf]
    %v142 = vld [vmem:[#allocation2 + $0x14] sm:$0xf]
    %v143 = vld [vmem:[#allocation2 + $0x18] sm:$0xf]
    %v144 = vld [vmem:[#allocation2 + $0x1c] sm:$0xf]
    %v145 = vld [vmem:[#allocation2 + $0x20] sm:$0xf]
    %v146 = vld [vmem:[#allocation2 + $0x24] sm:$0xf]
    %v147 = vld [vmem:[#allocation2 + $0x28] sm:$0xf]
    %v148 = vld [vmem:[#allocation2 + $0x2c] sm:$0xf]
    %v149 = vld [vmem:[#allocation2 + $0x30] sm:$0xf]
    %v150 = vld [vmem:[#allocation2 + $0x34] sm:$0xf]
    %v151 = vld [vmem:[#allocation2 + $0x38] sm:$0xf]
    %v152 = vld [vmem:[#allocation2 + $0x3c] sm:$0xf]
    %v153 = vld [vmem:[%s4] sm:$0x1]
    %v155 = vlaneseq
    %v156 = vshrl.u32 %v155, 7
    %v157 = vsub.s32 0, %v156
    %v158 = vrot.slane %v153, %v157
    %v176 = vunpack.c.l.b16 %v137
    %v177 = vunpack.c.l.b16 %v138
    %v178 = vunpack.c.l.b16 %v139
    %v179 = vunpack.c.l.b16 %v140
    %v180 = vunpack.c.l.b16 %v141
    %v181 = vunpack.c.l.b16 %v142
    %v182 = vunpack.c.l.b16 %v143
    %v183 = vunpack.c.l.b16 %v144
    %v184 = vunpack.c.l.b16 %v145
    %v185 = vunpack.c.l.b16 %v146
    %v186 = vunpack.c.l.b16 %v147
    %v187 = vunpack.c.l.b16 %v148
    %v188 = vunpack.c.l.b16 %v149
    %v189 = vunpack.c.l.b16 %v150
    %v190 = vunpack.c.l.b16 %v151
    %v191 = vunpack.c.l.b16 %v152
    %v192 = vpack.c.b16 %v177, %v176
    %v193 = vpack.c.b16 %v179, %v178
    %v194 = vpack.c.b16 %v181, %v180
    %v195 = vpack.c.b16 %v183, %v182
    %v196 = vpack.c.b16 %v185, %v184
    %v197 = vpack.c.b16 %v187, %v186
    %v198 = vpack.c.b16 %v189, %v188
    %v199 = vpack.c.b16 %v191, %v190
    %208 = vmatprep.subr.bf16.mxu0 0
    %209 = vmatpush1.bf16.msra.mxu0 %v199
    %210 = vmatprep.subr.bf16.mxu0 0
    %211 = vmatpush1.bf16.msra.mxu0 %v198
    %212 = vmatprep.subr.bf16.mxu0 0
    %213 = vmatpush1.bf16.msra.mxu0 %v197
    %214 = vmatprep.subr.bf16.mxu0 0
    %215 = vmatpush1.bf16.msra.mxu0 %v196
    %216 = vmatprep.subr.bf16.mxu0 0
    %217 = vmatpush1.bf16.msra.mxu0 %v195
    %218 = vmatprep.subr.bf16.mxu0 0
    %219 = vmatpush1.bf16.msra.mxu0 %v194
    %220 = vmatprep.subr.bf16.mxu0 0
    %221 = vmatpush1.bf16.msra.mxu0 %v193
    %222 = vmatprep.subr.bf16.mxu0 0
    %223 = vmatpush1.bf16.msra.mxu0 %v192
    %224 = vmatprep.subr.bf16.mxu0 0
    %225 = vmatpush2.bf16.msra.mxu0 0
    %226 = vmatprep.subr.bf16.mxu0 0
    %227 = vmatpush2.bf16.msra.mxu0 0
    %228 = vmatprep.subr.bf16.mxu0 0
    %229 = vmatpush2.bf16.msra.mxu0 0
    %230 = vmatprep.subr.bf16.mxu0 0
    %231 = vmatpush2.bf16.msra.mxu0 0
    %232 = vmatprep.subr.bf16.mxu0 0
    %233 = vmatpush2.bf16.msra.mxu0 0
    %234 = vmatprep.subr.bf16.mxu0 0
    %235 = vmatpush2.bf16.msra.mxu0 0
    %236 = vmatprep.subr.bf16.mxu0 0
    %237 = vmatpush2.bf16.msra.mxu0 0
    %238 = vmatprep.subr.bf16.mxu0 0
    %239 = vmatpush2.bf16.msra.mxu0 0
    %240 = vmatprep.mubr.bf16.mxu0 0
    %241 = vmatmul.mubr.bf16.gmra.mxu0 %v136
    %v242 = vpop.f32.mrf.mxu0
    %v243 = vadd.f32 %v158, %v242
    %v244 = vpop.f32.mrf.mxu0
    %v245 = vpop.f32.mrf.mxu0
    %v246 = vpop.f32.mrf.mxu0
    %247 = vdwg.mxu0
    %v248 = vmax.f32 %v243, 0.0
    %v249 = vpack.c.bf16 %v248, %v248
    %v250 = vld [vmem:[#allocation4] sm:$0xf]
    %v251 = vld [vmem:[#allocation4 + $0x4] sm:$0xf]
    %v252 = vld [vmem:[#allocation4 + $0x8] sm:$0xf]
    %v253 = vld [vmem:[#allocation4 + $0xc] sm:$0xf]
    %v254 = vld [vmem:[#allocation4 + $0x10] sm:$0xf]
    %v255 = vld [vmem:[#allocation4 + $0x14] sm:$0xf]
    %v256 = vld [vmem:[#allocation4 + $0x18] sm:$0xf]
    %v257 = vld [vmem:[#allocation4 + $0x1c] sm:$0xf]
    %v258 = vld [vmem:[#allocation4 + $0x20] sm:$0xf]
    %v259 = vld [vmem:[#allocation4 + $0x24] sm:$0xf]
    %v260 = vld [vmem:[#allocation4 + $0x28] sm:$0xf]
    %v261 = vld [vmem:[#allocation4 + $0x2c] sm:$0xf]
    %v262 = vld [vmem:[#allocation4 + $0x30] sm:$0xf]
    %v263 = vld [vmem:[#allocation4 + $0x34] sm:$0xf]
    %v264 = vld [vmem:[#allocation4 + $0x38] sm:$0xf]
    %v265 = vld [vmem:[#allocation4 + $0x3c] sm:$0xf]
    %v266 = vld [vmem:[%s6] sm:$0x1]
    %v268 = vlaneseq
    %v269 = vshrl.u32 %v268, 7
    %v270 = vsub.s32 0, %v269
    %v271 = vrot.slane %v266, %v270
    %v289 = vunpack.c.l.b16 %v250
    %v290 = vunpack.c.l.b16 %v251
    %v291 = vunpack.c.l.b16 %v252
    %v292 = vunpack.c.l.b16 %v253
    %v293 = vunpack.c.l.b16 %v254
    %v294 = vunpack.c.l.b16 %v255
    %v295 = vunpack.c.l.b16 %v256
    %v296 = vunpack.c.l.b16 %v257
    %v297 = vunpack.c.l.b16 %v258
    %v298 = vunpack.c.l.b16 %v259
    %v299 = vunpack.c.l.b16 %v260
    %v300 = vunpack.c.l.b16 %v261
    %v301 = vunpack.c.l.b16 %v262
    %v302 = vunpack.c.l.b16 %v263
    %v303 = vunpack.c.l.b16 %v264
    %v304 = vunpack.c.l.b16 %v265
    %v305 = vpack.c.b16 %v290, %v289
    %v306 = vpack.c.b16 %v292, %v291
    %v307 = vpack.c.b16 %v294, %v293
    %v308 = vpack.c.b16 %v296, %v295
    %v309 = vpack.c.b16 %v298, %v297
    %v310 = vpack.c.b16 %v300, %v299
    %v311 = vpack.c.b16 %v302, %v301
    %v312 = vpack.c.b16 %v304, %v303
    %321 = vmatprep.subr.bf16.mxu0 0
    %322 = vmatpush1.bf16.msra.mxu0 %v312
    %323 = vmatprep.subr.bf16.mxu0 0
    %324 = vmatpush1.bf16.msra.mxu0 %v311
    %325 = vmatprep.subr.bf16.mxu0 0
    %326 = vmatpush1.bf16.msra.mxu0 %v310
    %327 = vmatprep.subr.bf16.mxu0 0
    %328 = vmatpush1.bf16.msra.mxu0 %v309
    %329 = vmatprep.subr.bf16.mxu0 0
    %330 = vmatpush1.bf16.msra.mxu0 %v308
    %331 = vmatprep.subr.bf16.mxu0 0
    %332 = vmatpush1.bf16.msra.mxu0 %v307
    %333 = vmatprep.subr.bf16.mxu0 0
    %334 = vmatpush1.bf16.msra.mxu0 %v306
    %335 = vmatprep.subr.bf16.mxu0 0
    %336 = vmatpush1.bf16.msra.mxu0 %v305
    %337 = vmatprep.subr.bf16.mxu0 0
    %338 = vmatpush2.bf16.msra.mxu0 0
    %339 = vmatprep.subr.bf16.mxu0 0
    %340 = vmatpush2.bf16.msra.mxu0 0
    %341 = vmatprep.subr.bf16.mxu0 0
    %342 = vmatpush2.bf16.msra.mxu0 0
    %343 = vmatprep.subr.bf16.mxu0 0
    %344 = vmatpush2.bf16.msra.mxu0 0
    %345 = vmatprep.subr.bf16.mxu0 0
    %346 = vmatpush2.bf16.msra.mxu0 0
    %347 = vmatprep.subr.bf16.mxu0 0
    %348 = vmatpush2.bf16.msra.mxu0 0
    %349 = vmatprep.subr.bf16.mxu0 0
    %350 = vmatpush2.bf16.msra.mxu0 0
    %351 = vmatprep.subr.bf16.mxu0 0
    %352 = vmatpush2.bf16.msra.mxu0 0
    %353 = vmatprep.mubr.bf16.mxu0 0
    %354 = vmatmul.mubr.bf16.gmra.mxu0 %v249
    %v355 = vpop.f32.mrf.mxu0
    %v356 = vadd.f32 %v271, %v355
    %v357 = vpop.f32.mrf.mxu0
    %v358 = vpop.f32.mrf.mxu0
    %v359 = vpop.f32.mrf.mxu0
    %360 = vdwg.mxu0
    %v361 = vmax.f32 %v356, 0.0
    %v362 = vpack.c.bf16 %v361, %v361
    %v363 = vld [vmem:[#allocation6] sm:$0xf]
    %v364 = vld [vmem:[#allocation6 + $0x4] sm:$0xf]
    %v365 = vld [vmem:[#allocation6 + $0x8] sm:$0xf]
    %v366 = vld [vmem:[#allocation6 + $0xc] sm:$0xf]
    %v367 = vld [vmem:[#allocation6 + $0x10] sm:$0xf]
    %v368 = vld [vmem:[#allocation6 + $0x14] sm:$0xf]
    %v369 = vld [vmem:[#allocation6 + $0x18] sm:$0xf]
    %v370 = vld [vmem:[#allocation6 + $0x1c] sm:$0xf]
    %v371 = vld [vmem:[#allocation6 + $0x20] sm:$0xf]
    %v372 = vld [vmem:[#allocation6 + $0x24] sm:$0xf]
    %v373 = vld [vmem:[#allocation6 + $0x28] sm:$0xf]
    %v374 = vld [vmem:[#allocation6 + $0x2c] sm:$0xf]
    %v375 = vld [vmem:[#allocation6 + $0x30] sm:$0xf]
    %v376 = vld [vmem:[#allocation6 + $0x34] sm:$0xf]
    %v377 = vld [vmem:[#allocation6 + $0x38] sm:$0xf]
    %v378 = vld [vmem:[#allocation6 + $0x3c] sm:$0xf]
    %v379 = vld [vmem:[%s8] sm:$0x1]
    %v381 = vlaneseq
    %v382 = vshrl.u32 %v381, 7
    %v383 = vsub.s32 0, %v382
    %v384 = vrot.slane %v379, %v383
    %v402 = vunpack.c.l.b16 %v363
    %v403 = vunpack.c.l.b16 %v364
    %v404 = vunpack.c.l.b16 %v365
    %v405 = vunpack.c.l.b16 %v366
    %v406 = vunpack.c.l.b16 %v367
    %v407 = vunpack.c.l.b16 %v368
    %v408 = vunpack.c.l.b16 %v369
    %v409 = vunpack.c.l.b16 %v370
    %v410 = vunpack.c.l.b16 %v371
    %v411 = vunpack.c.l.b16 %v372
    %v412 = vunpack.c.l.b16 %v373
    %v413 = vunpack.c.l.b16 %v374
    %v414 = vunpack.c.l.b16 %v375
    %v415 = vunpack.c.l.b16 %v376
    %v416 = vunpack.c.l.b16 %v377
    %v417 = vunpack.c.l.b16 %v378
    %v418 = vpack.c.b16 %v403, %v402
    %v419 = vpack.c.b16 %v405, %v404
    %v420 = vpack.c.b16 %v407, %v406
    %v421 = vpack.c.b16 %v409, %v408
    %v422 = vpack.c.b16 %v411, %v410
    %v423 = vpack.c.b16 %v413, %v412
    %v424 = vpack.c.b16 %v415, %v414
    %v425 = vpack.c.b16 %v417, %v416
    %434 = vmatprep.subr.bf16.mxu0 0
    %435 = vmatpush1.bf16.msra.mxu0 %v425
    %436 = vmatprep.subr.bf16.mxu0 0
    %437 = vmatpush1.bf16.msra.mxu0 %v424
    %438 = vmatprep.subr.bf16.mxu0 0
    %439 = vmatpush1.bf16.msra.mxu0 %v423
    %440 = vmatprep.subr.bf16.mxu0 0
    %441 = vmatpush1.bf16.msra.mxu0 %v422
    %442 = vmatprep.subr.bf16.mxu0 0
    %443 = vmatpush1.bf16.msra.mxu0 %v421
    %444 = vmatprep.subr.bf16.mxu0 0
    %445 = vmatpush1.bf16.msra.mxu0 %v420
    %446 = vmatprep.subr.bf16.mxu0 0
    %447 = vmatpush1.bf16.msra.mxu0 %v419
    %448 = vmatprep.subr.bf16.mxu0 0
    %449 = vmatpush1.bf16.msra.mxu0 %v418
    %450 = vmatprep.subr.bf16.mxu0 0
    %451 = vmatpush2.bf16.msra.mxu0 0
    %452 = vmatprep.subr.bf16.mxu0 0
    %453 = vmatpush2.bf16.msra.mxu0 0
    %454 = vmatprep.subr.bf16.mxu0 0
    %455 = vmatpush2.bf16.msra.mxu0 0
    %456 = vmatprep.subr.bf16.mxu0 0
    %457 = vmatpush2.bf16.msra.mxu0 0
    %458 = vmatprep.subr.bf16.mxu0 0
    %459 = vmatpush2.bf16.msra.mxu0 0
    %460 = vmatprep.subr.bf16.mxu0 0
    %461 = vmatpush2.bf16.msra.mxu0 0
    %462 = vmatprep.subr.bf16.mxu0 0
    %463 = vmatpush2.bf16.msra.mxu0 0
    %464 = vmatprep.subr.bf16.mxu0 0
    %465 = vmatpush2.bf16.msra.mxu0 0
    %466 = vmatprep.mubr.bf16.mxu0 0
    %467 = vmatmul.mubr.bf16.gmra.mxu0 %v362
    %v468 = vpop.f32.mrf.mxu0
    %v469 = vadd.f32 %v384, %v468
    %v470 = vpop.f32.mrf.mxu0
    %v471 = vpop.f32.mrf.mxu0
    %v472 = vpop.f32.mrf.mxu0
    %473 = vdwg.mxu0
    %474 = vst [vmem:[%s9] sm:$0xff] %v469
    // Predicated region
    $region50: #{_mlp_forward_impl.1} parent=1 // pred_check
      _
    $region51: #{_mlp_forward_impl.1} parent=1 // pred_check_branch
      %476 = sbr.rel (0) target = $region53
    $region52: #{_mlp_forward_impl.1} parent=1 // pred_region
      _
    $region53: #{_mlp_forward_impl.1} parent=1 // pred_fallthru
      _
    // Predicated region
    $region54: #{_mlp_forward_impl.1} parent=1 // pred_check
      _
    $region55: #{_mlp_forward_impl.1} parent=1 // pred_check_branch
      %478 = sbr.rel (0) target = $region57
    $region56: #{_mlp_forward_impl.1} parent=1 // pred_region
      _
    $region57: #{_mlp_forward_impl.1} parent=1 // pred_fallthru
      _
    %479 = vsyncpa [#allocation3], 1
    %480 = vsyncpa [#allocation5], 1

// kernel: _mlp_forward_impl.1
$region0: #{_mlp_forward_impl.1}
  #allocation0 [shape = 'u32[]', space=smem, size = 0x4, offset = 0x4, fixed_abs, tag = 'smem constant byte address 0x4 - core index']
  #allocation1 [shape = 'u32[144,128]{1,0:T(1,128)}', space=vmem, size = 0x12000, scoped, tag = 'internal scratch']
  %s0 = inlined_call_operand.vmem [shape: f32[8,16], index: 0, kind: input, shape index: {}]
  %s1 = inlined_call_operand.vmem [shape: bf16[16,128], index: 1, kind: input, shape index: {}]
  %s2 = inlined_call_operand.vmem [shape: f32[1,128], index: 2, kind: input, shape index: {}]
  %s3 = inlined_call_operand.hbm [shape: bf16[128,128], index: 3, kind: input, shape index: {}]
  %s4 = inlined_call_operand.vmem [shape: f32[1,128], index: 4, kind: input, shape index: {}]
  %s5 = inlined_call_operand.hbm [shape: bf16[128,128], index: 5, kind: input, shape index: {}]
  %s6 = inlined_call_operand.vmem [shape: f32[1,128], index: 6, kind: input, shape index: {}]
  %s7 = inlined_call_operand.hbm [shape: bf16[128,128], index: 7, kind: input, shape index: {}]
  %s8 = inlined_call_operand.vmem [shape: f32[1,128], index: 8, kind: input, shape index: {}]
  %s9 = inlined_call_operand.vmem [shape: f32[8,128], index: 9, kind: output, shape index: {}]
  %s10 = sld [smem:[#allocation0]]
  $region58: #{_mlp_forward_impl.1} parent=0
    _
  %s12 = ssub.s32 1, %s10
  %s13 = scalar_select 0, %s12, %s10
  $region1: #{_mlp_forward_impl.1} parent=0
    #allocation2 [shape = 'u8[32768]{0}', space=vmem, size = 0x8000, scoped, tag = 'input window, operand 3, single buffered']
    #allocation3 [shape = 's32[1]{0}', space=sflag, size = 0x4, scoped, tag = 'scoped memory for _mlp_forward_impl.1']
    #allocation4 [shape = 'u8[32768]{0}', space=vmem, size = 0x8000, scoped, tag = 'input window, operand 5, single buffered']
    #allocation5 [shape = 's32[1]{0}', space=sflag, size = 0x4, scoped, tag = 'scoped memory for _mlp_forward_impl.1']
    #allocation6 [shape = 'u8[32768]{0}', space=vmem, size = 0x8000, scoped, tag = 'input window, operand 7, single buffered']
    %14 = vsyncpa [#allocation3], 0
    %15 = vsyncpa [#allocation5], 0
    // Predicated region
    $region2: #{_mlp_forward_impl.1} parent=1 // pred_check
      _
    $region3: #{_mlp_forward_impl.1} parent=1 // pred_check_branch
      %17 = sbr.rel (0) target = $region5
    $region4: #{_mlp_forward_impl.1} parent=1 // pred_region
      _
    $region5: #{_mlp_forward_impl.1} parent=1 // pred_fallthru
      _
    // Predicated region
    $region6: #{_mlp_forward_impl.1} parent=1 // pred_check
      _
    $region7: #{_mlp_forward_impl.1} parent=1 // pred_check_branch
      %19 = sbr.rel (0) target = $region9
    $region8: #{_mlp_forward_impl.1} parent=1 // pred_region
      _
    $region9: #{_mlp_forward_impl.1} parent=1 // pred_fallthru
      _
    // Predicated region
    $region10: #{_mlp_forward_impl.1} parent=1 // pred_check
      _
    $region11: #{_mlp_forward_impl.1} parent=1 // pred_check_branch
      %21 = sbr.rel (0) target = $region13
    $region12: #{_mlp_forward_impl.1} parent=1 // pred_region
      _
    $region13: #{_mlp_forward_impl.1} parent=1 // pred_fallthru
      _
    // Predicated region
    $region14: #{_mlp_forward_impl.1} parent=1 // pred_check
      _
    $region15: #{_mlp_forward_impl.1} parent=1 // pred_check_branch
      %23 = sbr.rel (0) target = $region17
    $region16: #{_mlp_forward_impl.1} parent=1 // pred_region
      %s25 = ssub.s32 1024, 1024
      %26 = vsyncadd [#allocation3], %s25
      %s27 = sshll.u32 [#allocation2], 4
      %s28 = int_to_ptr.vmem [resolvable:$true] %s27
      %33 = dma.hbm_to_vmem [thread:$0]  %s3, 1024, %s28, [#allocation3], 64, 64, 4
    $region17: #{_mlp_forward_impl.1} parent=1 // pred_fallthru
      _
    // Predicated region
    $region18: #{_mlp_forward_impl.1} parent=1 // pred_check
      _
    $region19: #{_mlp_forward_impl.1} parent=1 // pred_check_branch
      %35 = sbr.rel (0) target = $region21
    $region20: #{_mlp_forward_impl.1} parent=1 // pred_region
      _
    $region21: #{_mlp_forward_impl.1} parent=1 // pred_fallthru
      _
    // Predicated region
    $region22: #{_mlp_forward_impl.1} parent=1 // pred_check
      _
    $region23: #{_mlp_forward_impl.1} parent=1 // pred_check_branch
      %37 = sbr.rel (0) target = $region25
    $region24: #{_mlp_forward_impl.1} parent=1 // pred_region
      %s39 = ssub.s32 1024, 1024
      %40 = vsyncadd [#allocation5], %s39
      %s41 = sshll.u32 [#allocation4], 4
      %s42 = int_to_ptr.vmem [resolvable:$true] %s41
      %47 = dma.hbm_to_vmem [thread:$0]  %s5, 1024, %s42, [#allocation5], 64, 64, 4
    $region25: #{_mlp_forward_impl.1} parent=1 // pred_fallthru
      _
    // Predicated region
    $region26: #{_mlp_forward_impl.1} parent=1 // pred_check
      _
    $region27: #{_mlp_forward_impl.1} parent=1 // pred_check_branch
      %49 = sbr.rel (0) target = $region29
    $region28: #{_mlp_forward_impl.1} parent=1 // pred_region
      _
    $region29: #{_mlp_forward_impl.1} parent=1 // pred_fallthru
      _
    // Predicated region
    $region30: #{_mlp_forward_impl.1} parent=1 // pred_check
      _
    $region31: #{_mlp_forward_impl.1} parent=1 // pred_check_branch
      %51 = sbr.rel (0) target = $region33
    $region32: #{_mlp_forward_impl.1} parent=1 // pred_region
      %s53 = ssub.s32 1024, 1024
      %54 = vsyncadd [#allocation5], %s53
      %s55 = sshll.u32 [#allocation6], 4
      %s56 = int_to_ptr.vmem [resolvable:$true] %s55
      %61 = dma.hbm_to_vmem [thread:$0]  %s7, 1024, %s56, [#allocation5], 64, 64, 4
    $region33: #{_mlp_forward_impl.1} parent=1 // pred_fallthru
      _
    // Predicated region
    $region34: #{_mlp_forward_impl.1} parent=1 // pred_check
      _
    $region35: #{_mlp_forward_impl.1} parent=1 // pred_check_branch
      %63 = sbr.rel (0) target = $region37
    $region36: #{_mlp_forward_impl.1} parent=1 // pred_region
      _
    $region37: #{_mlp_forward_impl.1} parent=1 // pred_fallthru
      _
    // Predicated region
    $region38: #{_mlp_forward_impl.1} parent=1 // pred_check
      _
    $region39: #{_mlp_forward_impl.1} parent=1 // pred_check_branch
      %65 = sbr.rel (0) target = $region41
    $region40: #{_mlp_forward_impl.1} parent=1 // pred_region
      %66 = dma.done [#allocation3], 1024
    $region41: #{_mlp_forward_impl.1} parent=1 // pred_fallthru
      _
    // Predicated region
    $region42: #{_mlp_forward_impl.1} parent=1 // pred_check
      _
    $region43: #{_mlp_forward_impl.1} parent=1 // pred_check_branch
      %68 = sbr.rel (0) target = $region45
    $region44: #{_mlp_forward_impl.1} parent=1 // pred_region
      %69 = dma.done [#allocation5], 1024
    $region45: #{_mlp_forward_impl.1} parent=1 // pred_fallthru
      _
    // Predicated region
    $region46: #{_mlp_forward_impl.1} parent=1 // pred_check
      _
    $region47: #{_mlp_forward_impl.1} parent=1 // pred_check_branch
      %71 = sbr.rel (0) target = $region49
    $region48: #{_mlp_forward_impl.1} parent=1 // pred_region
      %72 = dma.done [#allocation5], 1024
    $region49: #{_mlp_forward_impl.1} parent=1 // pred_fallthru
      _
    %v74 = vld [vmem:[%s0] sm:$0xff]
    %v75 = vpack.c.bf16 %v74, %v74
    %v76 = vld [vmem:[%s1] sm:$0xf]
    %v77 = vld [vmem:[%s1 + $0x4] sm:$0xf]
    %v78 = vld [vmem:[%s2] sm:$0x1]
    %v80 = vlaneseq
    %v81 = vshrl.u32 %v80, 7
    %v82 = vsub.s32 0, %v81
    %v83 = vrot.slane %v78, %v82
    %v87 = vunpack.c.l.b16 %v76
    %v88 = vunpack.c.l.b16 %v77
    %v89 = vpack.c.b16 %v88, %v87
    %vm91 = vcmask 130048
    %v93 = vsel %vm91, %v75, 0
    %95 = vmatprep.subr.bf16.mxu0 0
    %96 = vmatpush1.bf16.msra.mxu0 0
    %97 = vmatprep.subr.bf16.mxu0 0
    %98 = vmatpush1.bf16.msra.mxu0 0
    %99 = vmatprep.subr.bf16.mxu0 0
    %100 = vmatpush1.bf16.msra.mxu0 0
    %101 = vmatprep.subr.bf16.mxu0 0
    %102 = vmatpush1.bf16.msra.mxu0 0
    %103 = vmatprep.subr.bf16.mxu0 0
    %104 = vmatpush1.bf16.msra.mxu0 0
    %105 = vmatprep.subr.bf16.mxu0 0
    %106 = vmatpush1.bf16.msra.mxu0 0
    %107 = vmatprep.subr.bf16.mxu0 0
    %108 = vmatpush1.bf16.msra.mxu0 0
    %109 = vmatprep.subr.bf16.mxu0 0
    %110 = vmatpush1.bf16.msra.mxu0 %v89
    %111 = vmatprep.subr.bf16.mxu0 0
    %112 = vmatpush2.bf16.msra.mxu0 0
    %113 = vmatprep.subr.bf16.mxu0 0
    %114 = vmatpush2.bf16.msra.mxu0 0
    %115 = vmatprep.subr.bf16.mxu0 0
    %116 = vmatpush2.bf16.msra.mxu0 0
    %117 = vmatprep.subr.bf16.mxu0 0
    %118 = vmatpush2.bf16.msra.mxu0 0
    %119 = vmatprep.subr.bf16.mxu0 0
    %120 = vmatpush2.bf16.msra.mxu0 0
    %121 = vmatprep.subr.bf16.mxu0 0
    %122 = vmatpush2.bf16.msra.mxu0 0
    %123 = vmatprep.subr.bf16.mxu0 0
    %124 = vmatpush2.bf16.msra.mxu0 0
    %125 = vmatprep.subr.bf16.mxu0 0
    %126 = vmatpush2.bf16.msra.mxu0 0
    %127 = vmatprep.mubr.bf16.mxu0 0
    %128 = vmatmul.mubr.bf16.gmra.mxu0 %v93
    %v129 = vpop.f32.mrf.mxu0
    %v130 = vadd.f32 %v83, %v129
    %v131 = vpop.f32.mrf.mxu0
    %v132 = vpop.f32.mrf.mxu0
    %v133 = vpop.f32.mrf.mxu0
    %134 = vdwg.mxu0
    %v135 = vmax.f32 %v130, 0.0
    %v136 = vpack.c.bf16 %v135, %v135
    %v137 = vld [vmem:[#allocation2] sm:$0xf]
    %v138 = vld [vmem:[#allocation2 + $0x4] sm:$0xf]
    %v139 = vld [vmem:[#allocation2 + $0x8] sm:$0xf]
    %v140 = vld [vmem:[#allocation2 + $0xc] sm:$0xf]
    %v141 = vld [vmem:[#allocation2 + $0x10] sm:$0xf]
    %v142 = vld [vmem:[#allocation2 + $0x14] sm:$0xf]
    %v143 = vld [vmem:[#allocation2 + $0x18] sm:$0xf]
    %v144 = vld [vmem:[#allocation2 + $0x1c] sm:$0xf]
    %v145 = vld [vmem:[#allocation2 + $0x20] sm:$0xf]
    %v146 = vld [vmem:[#allocation2 + $0x24] sm:$0xf]
    %v147 = vld [vmem:[#allocation2 + $0x28] sm:$0xf]
    %v148 = vld [vmem:[#allocation2 + $0x2c] sm:$0xf]
    %v149 = vld [vmem:[#allocation2 + $0x30] sm:$0xf]
    %v150 = vld [vmem:[#allocation2 + $0x34] sm:$0xf]
    %v151 = vld [vmem:[#allocation2 + $0x38] sm:$0xf]
    %v152 = vld [vmem:[#allocation2 + $0x3c] sm:$0xf]
    %v153 = vld [vmem:[%s4] sm:$0x1]
    %v155 = vlaneseq
    %v156 = vshrl.u32 %v155, 7
    %v157 = vsub.s32 0, %v156
    %v158 = vrot.slane %v153, %v157
    %v176 = vunpack.c.l.b16 %v137
    %v177 = vunpack.c.l.b16 %v138
    %v178 = vunpack.c.l.b16 %v139
    %v179 = vunpack.c.l.b16 %v140
    %v180 = vunpack.c.l.b16 %v141
    %v181 = vunpack.c.l.b16 %v142
    %v182 = vunpack.c.l.b16 %v143
    %v183 = vunpack.c.l.b16 %v144
    %v184 = vunpack.c.l.b16 %v145
    %v185 = vunpack.c.l.b16 %v146
    %v186 = vunpack.c.l.b16 %v147
    %v187 = vunpack.c.l.b16 %v148
    %v188 = vunpack.c.l.b16 %v149
    %v189 = vunpack.c.l.b16 %v150
    %v190 = vunpack.c.l.b16 %v151
    %v191 = vunpack.c.l.b16 %v152
    %v192 = vpack.c.b16 %v177, %v176
    %v193 = vpack.c.b16 %v179, %v178
    %v194 = vpack.c.b16 %v181, %v180
    %v195 = vpack.c.b16 %v183, %v182
    %v196 = vpack.c.b16 %v185, %v184
    %v197 = vpack.c.b16 %v187, %v186
    %v198 = vpack.c.b16 %v189, %v188
    %v199 = vpack.c.b16 %v191, %v190
    %208 = vmatprep.subr.bf16.mxu0 0
    %209 = vmatpush1.bf16.msra.mxu0 %v199
    %210 = vmatprep.subr.bf16.mxu0 0
    %211 = vmatpush1.bf16.msra.mxu0 %v198
    %212 = vmatprep.subr.bf16.mxu0 0
    %213 = vmatpush1.bf16.msra.mxu0 %v197
    %214 = vmatprep.subr.bf16.mxu0 0
    %215 = vmatpush1.bf16.msra.mxu0 %v196
    %216 = vmatprep.subr.bf16.mxu0 0
    %217 = vmatpush1.bf16.msra.mxu0 %v195
    %218 = vmatprep.subr.bf16.mxu0 0
    %219 = vmatpush1.bf16.msra.mxu0 %v194
    %220 = vmatprep.subr.bf16.mxu0 0
    %221 = vmatpush1.bf16.msra.mxu0 %v193
    %222 = vmatprep.subr.bf16.mxu0 0
    %223 = vmatpush1.bf16.msra.mxu0 %v192
    %224 = vmatprep.subr.bf16.mxu0 0
    %225 = vmatpush2.bf16.msra.mxu0 0
    %226 = vmatprep.subr.bf16.mxu0 0
    %227 = vmatpush2.bf16.msra.mxu0 0
    %228 = vmatprep.subr.bf16.mxu0 0
    %229 = vmatpush2.bf16.msra.mxu0 0
    %230 = vmatprep.subr.bf16.mxu0 0
    %231 = vmatpush2.bf16.msra.mxu0 0
    %232 = vmatprep.subr.bf16.mxu0 0
    %233 = vmatpush2.bf16.msra.mxu0 0
    %234 = vmatprep.subr.bf16.mxu0 0
    %235 = vmatpush2.bf16.msra.mxu0 0
    %236 = vmatprep.subr.bf16.mxu0 0
    %237 = vmatpush2.bf16.msra.mxu0 0
    %238 = vmatprep.subr.bf16.mxu0 0
    %239 = vmatpush2.bf16.msra.mxu0 0
    %240 = vmatprep.mubr.bf16.mxu0 0
    %241 = vmatmul.mubr.bf16.gmra.mxu0 %v136
    %v242 = vpop.f32.mrf.mxu0
    %v243 = vadd.f32 %v158, %v242
    %v244 = vpop.f32.mrf.mxu0
    %v245 = vpop.f32.mrf.mxu0
    %v246 = vpop.f32.mrf.mxu0
    %247 = vdwg.mxu0
    %v248 = vmax.f32 %v243, 0.0
    %v249 = vpack.c.bf16 %v248, %v248
    %v250 = vld [vmem:[#allocation4] sm:$0xf]
    %v251 = vld [vmem:[#allocation4 + $0x4] sm:$0xf]
    %v252 = vld [vmem:[#allocation4 + $0x8] sm:$0xf]
    %v253 = vld [vmem:[#allocation4 + $0xc] sm:$0xf]
    %v254 = vld [vmem:[#allocation4 + $0x10] sm:$0xf]
    %v255 = vld [vmem:[#allocation4 + $0x14] sm:$0xf]
    %v256 = vld [vmem:[#allocation4 + $0x18] sm:$0xf]
    %v257 = vld [vmem:[#allocation4 + $0x1c] sm:$0xf]
    %v258 = vld [vmem:[#allocation4 + $0x20] sm:$0xf]
    %v259 = vld [vmem:[#allocation4 + $0x24] sm:$0xf]
    %v260 = vld [vmem:[#allocation4 + $0x28] sm:$0xf]
    %v261 = vld [vmem:[#allocation4 + $0x2c] sm:$0xf]
    %v262 = vld [vmem:[#allocation4 + $0x30] sm:$0xf]
    %v263 = vld [vmem:[#allocation4 + $0x34] sm:$0xf]
    %v264 = vld [vmem:[#allocation4 + $0x38] sm:$0xf]
    %v265 = vld [vmem:[#allocation4 + $0x3c] sm:$0xf]
    %v266 = vld [vmem:[%s6] sm:$0x1]
    %v268 = vlaneseq
    %v269 = vshrl.u32 %v268, 7
    %v270 = vsub.s32 0, %v269
    %v271 = vrot.slane %v266, %v270
    %v289 = vunpack.c.l.b16 %v250
    %v290 = vunpack.c.l.b16 %v251
    %v291 = vunpack.c.l.b16 %v252
    %v292 = vunpack.c.l.b16 %v253
    %v293 = vunpack.c.l.b16 %v254
    %v294 = vunpack.c.l.b16 %v255
    %v295 = vunpack.c.l.b16 %v256
    %v296 = vunpack.c.l.b16 %v257
    %v297 = vunpack.c.l.b16 %v258
    %v298 = vunpack.c.l.b16 %v259
    %v299 = vunpack.c.l.b16 %v260
    %v300 = vunpack.c.l.b16 %v261
    %v301 = vunpack.c.l.b16 %v262
    %v302 = vunpack.c.l.b16 %v263
    %v303 = vunpack.c.l.b16 %v264
    %v304 = vunpack.c.l.b16 %v265
    %v305 = vpack.c.b16 %v290, %v289
    %v306 = vpack.c.b16 %v292, %v291
    %v307 = vpack.c.b16 %v294, %v293
    %v308 = vpack.c.b16 %v296, %v295
    %v309 = vpack.c.b16 %v298, %v297
    %v310 = vpack.c.b16 %v300, %v299
    %v311 = vpack.c.b16 %v302, %v301
    %v312 = vpack.c.b16 %v304, %v303
    %321 = vmatprep.subr.bf16.mxu0 0
    %322 = vmatpush1.bf16.msra.mxu0 %v312
    %323 = vmatprep.subr.bf16.mxu0 0
    %324 = vmatpush1.bf16.msra.mxu0 %v311
    %325 = vmatprep.subr.bf16.mxu0 0
    %326 = vmatpush1.bf16.msra.mxu0 %v310
    %327 = vmatprep.subr.bf16.mxu0 0
    %328 = vmatpush1.bf16.msra.mxu0 %v309
    %329 = vmatprep.subr.bf16.mxu0 0
    %330 = vmatpush1.bf16.msra.mxu0 %v308
    %331 = vmatprep.subr.bf16.mxu0 0
    %332 = vmatpush1.bf16.msra.mxu0 %v307
    %333 = vmatprep.subr.bf16.mxu0 0
    %334 = vmatpush1.bf16.msra.mxu0 %v306
    %335 = vmatprep.subr.bf16.mxu0 0
    %336 = vmatpush1.bf16.msra.mxu0 %v305
    %337 = vmatprep.subr.bf16.mxu0 0
    %338 = vmatpush2.bf16.msra.mxu0 0
    %339 = vmatprep.subr.bf16.mxu0 0
    %340 = vmatpush2.bf16.msra.mxu0 0
    %341 = vmatprep.subr.bf16.mxu0 0
    %342 = vmatpush2.bf16.msra.mxu0 0
    %343 = vmatprep.subr.bf16.mxu0 0
    %344 = vmatpush2.bf16.msra.mxu0 0
    %345 = vmatprep.subr.bf16.mxu0 0
    %346 = vmatpush2.bf16.msra.mxu0 0
    %347 = vmatprep.subr.bf16.mxu0 0
    %348 = vmatpush2.bf16.msra.mxu0 0
    %349 = vmatprep.subr.bf16.mxu0 0
    %350 = vmatpush2.bf16.msra.mxu0 0
    %351 = vmatprep.subr.bf16.mxu0 0
    %352 = vmatpush2.bf16.msra.mxu0 0
    %353 = vmatprep.mubr.bf16.mxu0 0
    %354 = vmatmul.mubr.bf16.gmra.mxu0 %v249
    %v355 = vpop.f32.mrf.mxu0
    %v356 = vadd.f32 %v271, %v355
    %v357 = vpop.f32.mrf.mxu0
    %v358 = vpop.f32.mrf.mxu0
    %v359 = vpop.f32.mrf.mxu0
    %360 = vdwg.mxu0
    %v361 = vmax.f32 %v356, 0.0
    %v362 = vpack.c.bf16 %v361, %v361
    %v363 = vld [vmem:[#allocation6] sm:$0xf]
    %v364 = vld [vmem:[#allocation6 + $0x4] sm:$0xf]
    %v365 = vld [vmem:[#allocation6 + $0x8] sm:$0xf]
    %v366 = vld [vmem:[#allocation6 + $0xc] sm:$0xf]
    %v367 = vld [vmem:[#allocation6 + $0x10] sm:$0xf]
    %v368 = vld [vmem:[#allocation6 + $0x14] sm:$0xf]
    %v369 = vld [vmem:[#allocation6 + $0x18] sm:$0xf]
    %v370 = vld [vmem:[#allocation6 + $0x1c] sm:$0xf]
    %v371 = vld [vmem:[#allocation6 + $0x20] sm:$0xf]
    %v372 = vld [vmem:[#allocation6 + $0x24] sm:$0xf]
    %v373 = vld [vmem:[#allocation6 + $0x28] sm:$0xf]
    %v374 = vld [vmem:[#allocation6 + $0x2c] sm:$0xf]
    %v375 = vld [vmem:[#allocation6 + $0x30] sm:$0xf]
    %v376 = vld [vmem:[#allocation6 + $0x34] sm:$0xf]
    %v377 = vld [vmem:[#allocation6 + $0x38] sm:$0xf]
    %v378 = vld [vmem:[#allocation6 + $0x3c] sm:$0xf]
    %v379 = vld [vmem:[%s8] sm:$0x1]
    %v381 = vlaneseq
    %v382 = vshrl.u32 %v381, 7
    %v383 = vsub.s32 0, %v382
    %v384 = vrot.slane %v379, %v383
    %v402 = vunpack.c.l.b16 %v363
    %v403 = vunpack.c.l.b16 %v364
    %v404 = vunpack.c.l.b16 %v365
    %v405 = vunpack.c.l.b16 %v366
    %v406 = vunpack.c.l.b16 %v367
    %v407 = vunpack.c.l.b16 %v368
    %v408 = vunpack.c.l.b16 %v369
    %v409 = vunpack.c.l.b16 %v370
    %v410 = vunpack.c.l.b16 %v371
    %v411 = vunpack.c.l.b16 %v372
    %v412 = vunpack.c.l.b16 %v373
    %v413 = vunpack.c.l.b16 %v374
    %v414 = vunpack.c.l.b16 %v375
    %v415 = vunpack.c.l.b16 %v376
    %v416 = vunpack.c.l.b16 %v377
    %v417 = vunpack.c.l.b16 %v378
    %v418 = vpack.c.b16 %v403, %v402
    %v419 = vpack.c.b16 %v405, %v404
    %v420 = vpack.c.b16 %v407, %v406
    %v421 = vpack.c.b16 %v409, %v408
    %v422 = vpack.c.b16 %v411, %v410
    %v423 = vpack.c.b16 %v413, %v412
    %v424 = vpack.c.b16 %v415, %v414
    %v425 = vpack.c.b16 %v417, %v416
    %434 = vmatprep.subr.bf16.mxu0 0
    %435 = vmatpush1.bf16.msra.mxu0 %v425
    %436 = vmatprep.subr.bf16.mxu0 0
    %437 = vmatpush1.bf16.msra.mxu0 %v424
    %438 = vmatprep.subr.bf16.mxu0 0
    %439 = vmatpush1.bf16.msra.mxu0 %v423
    %440 = vmatprep.subr.bf16.mxu0 0
    %441 = vmatpush1.bf16.msra.mxu0 %v422
    %442 = vmatprep.subr.bf16.mxu0 0
    %443 = vmatpush1.bf16.msra.mxu0 %v421
    %444 = vmatprep.subr.bf16.mxu0 0
    %445 = vmatpush1.bf16.msra.mxu0 %v420
    %446 = vmatprep.subr.bf16.mxu0 0
    %447 = vmatpush1.bf16.msra.mxu0 %v419
    %448 = vmatprep.subr.bf16.mxu0 0
    %449 = vmatpush1.bf16.msra.mxu0 %v418
    %450 = vmatprep.subr.bf16.mxu0 0
    %451 = vmatpush2.bf16.msra.mxu0 0
    %452 = vmatprep.subr.bf16.mxu0 0
    %453 = vmatpush2.bf16.msra.mxu0 0
    %454 = vmatprep.subr.bf16.mxu0 0
    %455 = vmatpush2.bf16.msra.mxu0 0
    %456 = vmatprep.subr.bf16.mxu0 0
    %457 = vmatpush2.bf16.msra.mxu0 0
    %458 = vmatprep.subr.bf16.mxu0 0
    %459 = vmatpush2.bf16.msra.mxu0 0
    %460 = vmatprep.subr.bf16.mxu0 0
    %461 = vmatpush2.bf16.msra.mxu0 0
    %462 = vmatprep.subr.bf16.mxu0 0
    %463 = vmatpush2.bf16.msra.mxu0 0
    %464 = vmatprep.subr.bf16.mxu0 0
    %465 = vmatpush2.bf16.msra.mxu0 0
    %466 = vmatprep.mubr.bf16.mxu0 0
    %467 = vmatmul.mubr.bf16.gmra.mxu0 %v362
    %v468 = vpop.f32.mrf.mxu0
    %v469 = vadd.f32 %v384, %v468
    %v470 = vpop.f32.mrf.mxu0
    %v471 = vpop.f32.mrf.mxu0
    %v472 = vpop.f32.mrf.mxu0
    %473 = vdwg.mxu0
    %474 = vst [vmem:[%s9] sm:$0xff] %v469
    // Predicated region
    $region50: #{_mlp_forward_impl.1} parent=1 // pred_check
      _
    $region51: #{_mlp_forward_impl.1} parent=1 // pred_check_branch
      %476 = sbr.rel (0) target = $region53
    $region52: #{_mlp_forward_impl.1} parent=1 // pred_region
      _
    $region53: #{_mlp_forward_impl.1} parent=1 // pred_fallthru
      _
    // Predicated region
    $region54: #{_mlp_forward_impl.1} parent=1 // pred_check
      _
    $region55: #{_mlp_forward_impl.1} parent=1 // pred_check_branch
      %478 = sbr.rel (0) target = $region57
    $region56: #{_mlp_forward_impl.1} parent=1 // pred_region
      _
    $region57: #{_mlp_forward_impl.1} parent=1 // pred_fallthru
      _
    %479 = vsyncpa [#allocation3], 1
    %480 = vsyncpa [#allocation5], 1

</llo_original>
